<compile_context>
chip_gen: v6e
topology: v6e:2x2x1
jax: 0.10.0
libtpu: 0.0.40
codegen_flags: <defaults>
</compile_context>

<pallas_src>
import jax
import jax.numpy as jnp
from jax.experimental import pallas as pl
from jax.experimental.pallas import tpu as pltpu


def _round_up(x, m):
    return (x + m - 1) // m * m


def generator_head_kernel(cov_ref, x_ref, o_ref):
    """out = cov_aug @ x_aug  (mu folded into the contraction), f32 accumulation."""
    o_ref[...] = jnp.dot(
        cov_ref[...], x_ref[...], preferred_element_type=jnp.float32
    ).astype(o_ref.dtype)


def generator_forward(cov, mu, x, *, col_tile=128):
    """Pallas equivalent of Generator.forward's defined compute.

    cov: (F, F), mu: (F, 1), x: (F, N)  ->  (F, N) == mu + cov @ x
    """
    F, N = x.shape
    assert cov.shape == (F, F) and mu.shape == (F, 1)

    dtype = x.dtype
    # Pad shapes toward hardware-friendly tiles:
    #   Fp : sublane-aligned output rows
    #   K  : contraction dim = F (cov) + 1 (mu column), sublane-aligned
    #   Np : lane-dense column count (multiple of 128)
    Fp = _round_up(F, 8)
    K = _round_up(F + 1, 8)
    Np = _round_up(max(N, col_tile), col_tile)

    # Fold mu into the matmul: cov_aug[:, F] = mu, x_aug[F, :] = 1.
    cov_aug = jnp.zeros((Fp, K), dtype)
    cov_aug = cov_aug.at[:F, :F].set(cov.astype(dtype))
    cov_aug = cov_aug.at[:F, F].set(mu[:, 0].astype(dtype))

    x_aug = jnp.zeros((K, Np), dtype)
    x_aug = x_aug.at[:F, :N].set(x)
    x_aug = x_aug.at[F, :].set(jnp.ones((Np,), dtype))

    grid = (Np // col_tile,)
    out_padded = pl.pallas_call(
        generator_head_kernel,
        out_shape=jax.ShapeDtypeStruct((Fp, Np), dtype),
        grid_spec=pl.GridSpec(
            grid=grid,
            in_specs=[
                # cov_aug: same (resident) block for every column tile.
                pl.BlockSpec((Fp, K), lambda j: (0, 0)),
                # x_aug: lane-dense 128-wide column tiles.
                pl.BlockSpec((K, col_tile), lambda j: (0, j)),
            ],
            out_specs=pl.BlockSpec((Fp, col_tile), lambda j: (0, j)),
        ),
        compiler_params=pltpu.CompilerParams(
            # Independent column tiles -> shard across TensorCores (v7x megacore).
            dimension_semantics=("parallel",)
        ),
    )(cov_aug, x_aug)

    out = out_padded[:F, :N]

    # TODO(synk): IterativeSkip / SkipBlockU are external (their forward source is not
    # part of the provided module), so the spectral-upsampling skip stack is not
    # reproduced here; only the module's own defined compute (mu + cov @ x) is kernelized.
    return out


def _xavier_uniform(key, shape, gain=1.0, dtype=jnp.float32):
    fan_in, fan_out = shape[1], shape[0]
    bound = gain * (6.0 / (fan_in + fan_out)) ** 0.5
    return jax.random.uniform(key, shape, dtype, -bound, bound)


if __name__ == "__main__":
    # Setup consistent with the module:
    #   nb_freq[-1] = 32 (spectral latent size) -> mu: (32, 1), cov: (32, 32)
    F, N = 32, 8
    key = jax.random.PRNGKey(0)
    k_mu, k_cov, k_x, k_xb = jax.random.split(key, 4)

    mu = _xavier_uniform(k_mu, (F, 1))      # torch.nn.init.xavier_uniform_(self.mu)
    cov = _xavier_uniform(k_cov, (F, F))    # torch.nn.init.xavier_uniform_(self.cov)

    # Small latent input (N=8), padded internally to a lane-dense 128 columns.
    x = jax.random.normal(k_x, (F, N), jnp.float32)
    out = jax.block_until_ready(generator_forward(cov, mu, x))
    ref = mu + cov @ x
    assert out.shape == (F, N)
    assert jnp.allclose(out, ref, atol=1e-5, rtol=1e-5)

    # Batched latent columns (N=256) -> grid=(2,), exercises the parallel axis.
    xb = jax.random.normal(k_xb, (F, 256), jnp.float32)
    out_b = jax.block_until_ready(generator_forward(cov, mu, xb))
    ref_b = mu + cov @ xb
    assert out_b.shape == (F, 256)
    assert jnp.allclose(out_b, ref_b, atol=1e-5, rtol=1e-5)

    print("KERNEL_OK")
</pallas_src>

<mosaic_0001>
module attributes {stable_mosaic.version = 11 : i64} {
  func.func @generator_head_kernel(%arg0: i32, %arg1: memref<32x40xf32, #tpu.memory_space<vmem>>, %arg2: memref<40x128xf32, #tpu.memory_space<vmem>>, %arg3: memref<32x128xf32, #tpu.memory_space<vmem>>) attributes {dimension_semantics = [#tpu.dimension_semantics<parallel>], iteration_bounds = array<i64: 1>, scalar_prefetch = 0 : i64, scratch_operands = 0 : i64, tpu.core_type = #tpu.core_type<tc>, window_params = [{pipeline_mode = #tpu.pipeline_mode<synchronous>, transform_indices = @transform_0, window_bounds = array<i64: 32, 40>}, {transform_indices = @transform_1, window_bounds = array<i64: 40, 128>}, {transform_indices = @transform_2, window_bounds = array<i64: 32, 128>}]} {
    %c0 = arith.constant 0 : index
    %c0_0 = arith.constant 0 : index
    %0 = vector.load %arg1[%c0, %c0_0] : memref<32x40xf32, #tpu.memory_space<vmem>>, vector<32x40xf32>
    %c0_1 = arith.constant 0 : index
    %c0_2 = arith.constant 0 : index
    %1 = vector.load %arg2[%c0_1, %c0_2] : memref<40x128xf32, #tpu.memory_space<vmem>>, vector<40x128xf32>
    %cst = arith.constant dense<0.000000e+00> : vector<32x128xf32>
    %2 = tpu.matmul %0, %1, %cst {dimension_numbers = #tpu.dot_dimension_numbers<[1], [0], [0], [1], [0, 0, 1, 1], [], []>} : vector<32x40xf32>, vector<40x128xf32>, vector<32x128xf32> -> vector<32x128xf32>
    %c0_3 = arith.constant 0 : index
    %c0_4 = arith.constant 0 : index
    %3 = vector.load %arg3[%c0_3, %c0_4] : memref<32x128xf32, #tpu.memory_space<vmem>>, vector<32x128xf32>
    tpu.vector_store %arg3[%c0_3, %c0_4], %2 {strides = array<i32>} : memref<32x128xf32, #tpu.memory_space<vmem>>, vector<32x128xf32>,
    return
  }
  func.func @transform_0(%arg0: i32) -> (i32, i32) {
    %c0_i32 = arith.constant 0 : i32
    %c0_i32_0 = arith.constant 0 : i32
    %c0_i32_1 = arith.constant 0 : i32
    return %c0_i32, %c0_i32_0 : i32, i32
  }
  func.func @transform_1(%arg0: i32) -> (i32, i32) {
    %c0_i32 = arith.constant 0 : i32
    %c0_i32_0 = arith.constant 0 : i32
    return %c0_i32, %arg0 : i32, i32
  }
  func.func @transform_2(%arg0: i32) -> (i32, i32) {
    %c0_i32 = arith.constant 0 : i32
    %c0_i32_0 = arith.constant 0 : i32
    return %c0_i32, %arg0 : i32, i32
  }
}

</mosaic_0001>

<llo_original>
// kernel: tpu_custom_call.1
$region0: #{tpu_custom_call.1}
  #allocation0 [shape = 'u32[]', space=smem, size = 0x4, offset = 0x4, fixed_abs, tag = 'smem constant byte address 0x4 - core index']
  #allocation1 [shape = 'u32[144,128]{1,0:T(1,128)}', space=vmem, size = 0x12000, scoped, tag = 'internal scratch']
  %s0 = inlined_call_operand.hbm [shape: f32[32,40], index: 0, kind: input, shape index: {}]
  %s1 = inlined_call_operand.hbm [shape: f32[40,128], index: 1, kind: input, shape index: {}]
  %s2 = inlined_call_operand.hbm [shape: f32[32,128], index: 2, kind: output, shape index: {}]
  %s3 = sld [smem:[#allocation0]]
  $region26: #{tpu_custom_call.1} parent=0
    _
  %s5 = ssub.s32 1, %s3
  %s6 = scalar_select 0, %s5, %s3
  $region1: #{tpu_custom_call.1} parent=0
    #allocation2 [shape = 'u8[16384]{0}', space=vmem, size = 0x4000, scoped, tag = 'input window, operand 0, single buffered']
    #allocation3 [shape = 's32[1]{0}', space=sflag, size = 0x4, scoped, tag = 'scoped memory for tpu_custom_call.1']
    #allocation4 [shape = 's32[1]{0}', space=sflag, size = 0x4, scoped, tag = 'scoped memory for tpu_custom_call.1']
    #allocation5 [shape = 'u8[20480]{0}', space=vmem, size = 0x5000, scoped, tag = 'input window, operand 1, single buffered']
    #allocation6 [shape = 's32[1]{0}', space=sflag, size = 0x4, scoped, tag = 'scoped memory for tpu_custom_call.1']
    #allocation7 [shape = 'u8[16384]{0}', space=vmem, size = 0x4000, scoped, tag = 'output window, operand 0, single buffered']
    %7 = vsyncpa [#allocation3], 0
    %8 = vsyncpa [#allocation6], 0
    %9 = vsyncpa [#allocation4], 0
    // Predicated region
    $region2: #{tpu_custom_call.1} parent=1 // pred_check
      _
    $region3: #{tpu_custom_call.1} parent=1 // pred_check_branch
      %11 = sbr.rel (0) target = $region5
    $region4: #{tpu_custom_call.1} parent=1 // pred_region
      %s13 = ssub.s32 512, 512
      %14 = vsyncadd [#allocation3], %s13
      %s15 = sshll.u32 [#allocation2], 4
      %s16 = int_to_ptr.vmem [resolvable:$true] %s15
      %21 = dma.hbm_to_vmem [thread:$0]  %s0, 512, %s16, [#allocation3], 128, 128, 8
    $region5: #{tpu_custom_call.1} parent=1 // pred_fallthru
      _
    // Predicated region
    $region6: #{tpu_custom_call.1} parent=1 // pred_check
      _
    $region7: #{tpu_custom_call.1} parent=1 // pred_check_branch
      %23 = sbr.rel (0) target = $region9
    $region8: #{tpu_custom_call.1} parent=1 // pred_region
      %s25 = ssub.s32 640, 640
      %26 = vsyncadd [#allocation6], %s25
      %s27 = sshll.u32 [#allocation5], 4
      %s28 = int_to_ptr.vmem [resolvable:$true] %s27
      %33 = dma.hbm_to_vmem [thread:$0]  %s1, 640, %s28, [#allocation6], 128, 128, 8
    $region9: #{tpu_custom_call.1} parent=1 // pred_fallthru
      _
    // Predicated region
    $region10: #{tpu_custom_call.1} parent=1 // pred_check
      _
    $region11: #{tpu_custom_call.1} parent=1 // pred_check_branch
      %35 = sbr.rel (0) target = $region13
    $region12: #{tpu_custom_call.1} parent=1 // pred_region
      %36 = dma.done [#allocation3], 512
    $region13: #{tpu_custom_call.1} parent=1 // pred_fallthru
      _
    // Predicated region
    $region14: #{tpu_custom_call.1} parent=1 // pred_check
      _
    $region15: #{tpu_custom_call.1} parent=1 // pred_check_branch
      %38 = sbr.rel (0) target = $region17
    $region16: #{tpu_custom_call.1} parent=1 // pred_region
      %39 = dma.done [#allocation6], 640
    $region17: #{tpu_custom_call.1} parent=1 // pred_fallthru
      _
    %v40 = vld [vmem:[#allocation2] sm:$0xff]
    %v41 = vld [vmem:[#allocation2 + $0x8] sm:$0xff]
    %v42 = vld [vmem:[#allocation2 + $0x10] sm:$0xff]
    %v43 = vld [vmem:[#allocation2 + $0x18] sm:$0xff]
    %v44 = vld [vmem:[#allocation5] sm:$0xff]
    %v45 = vld [vmem:[#allocation5 + $0x8] sm:$0xff]
    %v46 = vld [vmem:[#allocation5 + $0x10] sm:$0xff]
    %v47 = vld [vmem:[#allocation5 + $0x18] sm:$0xff]
    %v48 = vld [vmem:[#allocation5 + $0x20] sm:$0xff]
    %vm49 = vcmask 326656
    %v51 = vsel %vm49, %v40, 0
    %v54 = vsel %vm49, %v41, 0
    %v57 = vsel %vm49, %v42, 0
    %v60 = vsel %vm49, %v43, 0
    %62 = vmatprep.subr.mxu0 0.0
    %63 = vmatpush1.msra.mxu0 0.0
    %64 = vmatprep.subr.mxu0 0.0
    %65 = vmatpush1.msra.mxu0 0.0
    %66 = vmatprep.subr.mxu0 0.0
    %67 = vmatpush1.msra.mxu0 0.0
    %68 = vmatprep.subr.mxu0 0.0
    %69 = vmatpush1.msra.mxu0 0.0
    %70 = vmatprep.subr.mxu0 0.0
    %71 = vmatpush1.msra.mxu0 0.0
    %72 = vmatprep.subr.mxu0 0.0
    %73 = vmatpush1.msra.mxu0 0.0
    %74 = vmatprep.subr.mxu0 0.0
    %75 = vmatpush1.msra.mxu0 0.0
    %76 = vmatprep.subr.mxu0 0.0
    %77 = vmatpush1.msra.mxu0 0.0
    %78 = vmatprep.subr.mxu0 0.0
    %79 = vmatpush1.msra.mxu0 0.0
    %80 = vmatprep.subr.mxu0 0.0
    %81 = vmatpush1.msra.mxu0 0.0
    %82 = vmatprep.subr.mxu0 0.0
    %83 = vmatpush1.msra.mxu0 0.0
    %84 = vmatprep.subr.mxu0 0.0
    %85 = vmatpush1.msra.mxu0 %v48
    %86 = vmatprep.subr.mxu0 0.0
    %87 = vmatpush1.msra.mxu0 %v47
    %88 = vmatprep.subr.mxu0 0.0
    %89 = vmatpush1.msra.mxu0 %v46
    %90 = vmatprep.subr.mxu0 0.0
    %91 = vmatpush1.msra.mxu0 %v45
    %92 = vmatprep.subr.mxu0 0.0
    %93 = vmatpush1.msra.mxu0 %v44
    %94 = vmatprep.subr.mxu0 0.0
    %95 = vmatpush2.msra.mxu0 0.0
    %96 = vmatprep.subr.mxu0 0.0
    %97 = vmatpush2.msra.mxu0 0.0
    %98 = vmatprep.subr.mxu0 0.0
    %99 = vmatpush2.msra.mxu0 0.0
    %100 = vmatprep.subr.mxu0 0.0
    %101 = vmatpush2.msra.mxu0 0.0
    %102 = vmatprep.subr.mxu0 0.0
    %103 = vmatpush2.msra.mxu0 0.0
    %104 = vmatprep.subr.mxu0 0.0
    %105 = vmatpush2.msra.mxu0 0.0
    %106 = vmatprep.subr.mxu0 0.0
    %107 = vmatpush2.msra.mxu0 0.0
    %108 = vmatprep.subr.mxu0 0.0
    %109 = vmatpush2.msra.mxu0 0.0
    %110 = vmatprep.subr.mxu0 0.0
    %111 = vmatpush2.msra.mxu0 0.0
    %112 = vmatprep.subr.mxu0 0.0
    %113 = vmatpush2.msra.mxu0 0.0
    %114 = vmatprep.subr.mxu0 0.0
    %115 = vmatpush2.msra.mxu0 0.0
    %116 = vmatprep.subr.mxu0 0.0
    %117 = vmatpush2.msra.mxu0 0.0
    %118 = vmatprep.subr.mxu0 0.0
    %119 = vmatpush2.msra.mxu0 0.0
    %120 = vmatprep.subr.mxu0 0.0
    %121 = vmatpush2.msra.mxu0 0.0
    %122 = vmatprep.subr.mxu0 0.0
    %123 = vmatpush2.msra.mxu0 0.0
    %124 = vmatprep.subr.mxu0 0.0
    %125 = vmatpush2.msra.mxu0 0.0
    %126 = vmatprep.mubr.f32.mxu0 0.0
    %127 = vmatmul.mubr.f32.gmra.mxu0 %v51
    %v128 = vpop.f32.mrf.mxu0
    %v129 = vadd.f32 0.0, %v128
    %v130 = vpop.f32.mrf.mxu0
    %131 = vmatprep.mubr.f32.mxu0 0.0
    %132 = vmatmul.mubr.f32.gmra.mxu0 %v54
    %v133 = vpop.f32.mrf.mxu0
    %v134 = vadd.f32 0.0, %v133
    %v135 = vpop.f32.mrf.mxu0
    %136 = vmatprep.mubr.f32.mxu0 0.0
    %137 = vmatmul.mubr.f32.gmra.mxu0 %v57
    %v138 = vpop.f32.mrf.mxu0
    %v139 = vadd.f32 0.0, %v138
    %v140 = vpop.f32.mrf.mxu0
    %141 = vmatprep.mubr.f32.mxu0 0.0
    %142 = vmatmul.mubr.f32.gmra.mxu0 %v60
    %v143 = vpop.f32.mrf.mxu0
    %v144 = vadd.f32 0.0, %v143
    %v145 = vpop.f32.mrf.mxu0
    %146 = vdwg.mxu0
    %147 = vst [vmem:[#allocation7] sm:$0xff] %v129
    %148 = vst [vmem:[#allocation7 + $0x8] sm:$0xff] %v134
    %149 = vst [vmem:[#allocation7 + $0x10] sm:$0xff] %v139
    %150 = vst [vmem:[#allocation7 + $0x18] sm:$0xff] %v144
    // Predicated region
    $region18: #{tpu_custom_call.1} parent=1 // pred_check
      _
    $region19: #{tpu_custom_call.1} parent=1 // pred_check_branch
      %152 = sbr.rel (0) target = $region21
    $region20: #{tpu_custom_call.1} parent=1 // pred_region
      %s154 = ssub.s32 512, 512
      %155 = vsyncadd [#allocation4], %s154
      %s156 = sshll.u32 [#allocation7], 4
      %s157 = int_to_ptr.vmem [resolvable:$true] %s156
      %162 = dma.vmem_to_hbm [thread:$0]  %s157, 512, %s2, [#allocation4], 128, 128, 8
    $region21: #{tpu_custom_call.1} parent=1 // pred_fallthru
      _
    // Predicated region
    $region22: #{tpu_custom_call.1} parent=1 // pred_check
      _
    $region23: #{tpu_custom_call.1} parent=1 // pred_check_branch
      %164 = sbr.rel (0) target = $region25
    $region24: #{tpu_custom_call.1} parent=1 // pred_region
      %165 = dma.done [#allocation4], 512
    $region25: #{tpu_custom_call.1} parent=1 // pred_fallthru
      _
    %166 = vsyncpa [#allocation3], 1
    %167 = vsyncpa [#allocation6], 1
    %168 = vsyncpa [#allocation4], 1

</llo_original>
